<compile_context>
chip_gen: v7x
topology: tpu7x:2x2x1
jax: 0.10.0
libtpu: 0.0.40
codegen_flags: <defaults>
</compile_context>

<pallas_src>
import functools

import jax
import jax.numpy as jnp
import numpy as np
from jax.experimental import pallas as pl
from jax.experimental.pallas import tpu as pltpu

# ---- module hyper-parameters (small, consistent with the PyTorch __init__) ----
Z_SIZE = 8
HIDDEN = 64
CONTINUOUS_DIM = 32
IP_DIM = 4
PORT_DIM = 8
PROTOCOL_DIM = 2
CATEGORICAL_DIM = 2 * IP_DIM + 2 * PORT_DIM + PROTOCOL_DIM        # 26
INPUT_DIM = CONTINUOUS_DIM + CATEGORICAL_DIM                       # 58
CONT_RAW_DIM = 67                                                  # fixed in the module
BATCH = 2

# ---- packed output slab layout (lane-dense, padded to a multiple of 128) ----
OFF_DEC = 0
OFF_CONT = OFF_DEC + INPUT_DIM                                     # 58
OFF_MU = OFF_CONT + CONT_RAW_DIM                                   # 125
OFF_LOGVAR = OFF_MU + Z_SIZE                                       # 133
OUT_USED = OFF_LOGVAR + Z_SIZE                                     # 141
OUT_SLAB = 256                                                     # next multiple of 128

# max batch rows per grid step (weights ~30 KB, activations ~1 KB/row: VMEM is
# never the binding constraint, so a large batch tile is free on all chips)
MAX_BATCH_TILE = 256


def _idsvae_kernel(x_ref, eps_ref,
                   we1_ref, we2_ref, we3_ref, wml_ref,
                   wd1_ref, wd2_ref, wd3_ref, wd4_ref,
                   wcf_ref, bc_ref,
                   out_ref):
    """Whole IDSVAE.forward for one batch tile; single packed lane-dense output."""
    bf16 = jnp.bfloat16
    f32 = jnp.float32

    x = x_ref[...]                                                  # (tb, 58) bf16

    # ---- encoder: 3x (Linear no-bias + ReLU), bf16 in / f32 accumulate ----
    h = jnp.maximum(jnp.dot(x, we1_ref[...], preferred_element_type=f32), 0.0).astype(bf16)
    h = jnp.maximum(jnp.dot(h, we2_ref[...], preferred_element_type=f32), 0.0).astype(bf16)
    h = jnp.maximum(jnp.dot(h, we3_ref[...], preferred_element_type=f32), 0.0).astype(bf16)

    # ---- fused mu/logvar head: one (16 -> 16) matmul ----
    muvar = jnp.dot(h, wml_ref[...], preferred_element_type=f32)    # (tb, 16) f32
    mu = muvar[:, :Z_SIZE]
    logvar = muvar[:, Z_SIZE:]

    # ---- reparameterize in f32: z = mu + eps * exp(0.5 * logvar) ----
    z = (mu + eps_ref[...] * jnp.exp(0.5 * logvar)).astype(bf16)

    # ---- decoder: 3x (Linear no-bias + ReLU) + Linear no-bias ----
    d = jnp.maximum(jnp.dot(z, wd1_ref[...], preferred_element_type=f32), 0.0).astype(bf16)
    d = jnp.maximum(jnp.dot(d, wd2_ref[...], preferred_element_type=f32), 0.0).astype(bf16)
    d = jnp.maximum(jnp.dot(d, wd3_ref[...], preferred_element_type=f32), 0.0).astype(bf16)
    out = jnp.dot(d, wd4_ref[...], preferred_element_type=f32)      # (tb, 58) f32

    # ---- continuous head folded into the decoder weights:
    #      sigmoid(out[:, cat:] @ wc + bc) == sigmoid(d @ (wd4[:, cat:] @ wc) + bc)
    cont = jax.nn.sigmoid(
        jnp.dot(d, wcf_ref[...], preferred_element_type=f32) + bc_ref[...])  # (tb, 67)

    # ---- pack everything into one lane-dense slab and store once ----
    tb = out.shape[0]
    pad = jnp.zeros((tb, OUT_SLAB - OUT_USED), f32)
    out_ref[...] = jnp.concatenate([out, cont, muvar, pad], axis=-1)


def _prepare_kernel_params(p):
    """Fuse/cast weights for the kernel (zero accuracy cost: all ops are linear)."""
    bf16 = jnp.bfloat16
    f32 = jnp.float32
    wml = jnp.concatenate([p["wm"], p["wl"]], axis=1)               # (16, 16)
    wcf = p["wd4"][:, CATEGORICAL_DIM:].astype(f32) @ p["wc"].astype(f32)  # (64, 67)
    return dict(
        we1=p["we1"].astype(bf16), we2=p["we2"].astype(bf16), we3=p["we3"].astype(bf16),
        wml=wml.astype(bf16),
        wd1=p["wd1"].astype(bf16), wd2=p["wd2"].astype(bf16), wd3=p["wd3"].astype(bf16),
        wd4=p["wd4"].astype(bf16),
        wcf=wcf.astype(bf16),
        bc=p["bc"].astype(f32),                                     # (1, 67)
    )


@jax.jit
def idsvae_forward(x, eps, params):
    """Runs the Pallas kernel, then slices the packed slab into the module outputs."""
    b = x.shape[0]
    tb = b if b <= MAX_BATCH_TILE else MAX_BATCH_TILE
    grid = (pl.cdiv(b, tb),)

    kp = _prepare_kernel_params(params)
    xb = x.astype(jnp.bfloat16)
    eps = eps.astype(jnp.float32)

    # weights: full-array blocks with constant index maps -> resident in VMEM
    wspec = lambda w: pl.BlockSpec(w.shape, lambda i: (0,) * w.ndim)

    slab = pl.pallas_call(
        _idsvae_kernel,
        out_shape=jax.ShapeDtypeStruct((b, OUT_SLAB), jnp.float32),
        grid=grid,
        in_specs=[
            pl.BlockSpec((tb, INPUT_DIM), lambda i: (i, 0)),        # x
            pl.BlockSpec((tb, Z_SIZE), lambda i: (i, 0)),           # eps
            wspec(kp["we1"]), wspec(kp["we2"]), wspec(kp["we3"]), wspec(kp["wml"]),
            wspec(kp["wd1"]), wspec(kp["wd2"]), wspec(kp["wd3"]), wspec(kp["wd4"]),
            wspec(kp["wcf"]), wspec(kp["bc"]),
        ],
        out_specs=pl.BlockSpec((tb, OUT_SLAB), lambda i: (i, 0)),
        compiler_params=pltpu.CompilerParams(
            dimension_semantics=("parallel",)),                     # shards batch over TCs on v7x
    )(
        xb, eps,
        kp["we1"], kp["we2"], kp["we3"], kp["wml"],
        kp["wd1"], kp["wd2"], kp["wd3"], kp["wd4"],
        kp["wcf"], kp["bc"],
    )

    # Glue: slice the packed slab (decode_v2 semantics).
    out = slab[:, OFF_DEC:OFF_DEC + INPUT_DIM]
    cont = slab[:, OFF_CONT:OFF_CONT + CONT_RAW_DIM]
    mu = slab[:, OFF_MU:OFF_MU + Z_SIZE]
    logvar = slab[:, OFF_LOGVAR:OFF_LOGVAR + Z_SIZE]

    cats = out[..., :CATEGORICAL_DIM]
    sip_hat = cats[..., :IP_DIM]
    dip_hat = cats[..., IP_DIM:2 * IP_DIM]
    sport_hat = cats[..., 2 * IP_DIM:2 * IP_DIM + PORT_DIM]
    dport_hat = cats[..., 2 * IP_DIM + PORT_DIM:2 * IP_DIM + 2 * PORT_DIM]
    protocol_hat = cats[..., 2 * IP_DIM + 2 * PORT_DIM:]
    return (sip_hat, dip_hat, sport_hat, dport_hat, protocol_hat, cont), mu, logvar


def _init_params(key):
    """Deterministic synthetic weights, shapes (in_features, out_features)
    (transpose of the PyTorch nn.Linear weight layout)."""
    ks = jax.random.split(key, 12)
    scale = 0.1
    n = lambda k, s: (scale * jax.random.normal(k, s, jnp.float32))
    return {
        # encoder
        "we1": n(ks[0], (INPUT_DIM, HIDDEN)),
        "we2": n(ks[1], (HIDDEN, HIDDEN // 2)),
        "we3": n(ks[2], (HIDDEN // 2, HIDDEN // 4)),
        "wm":  n(ks[3], (HIDDEN // 4, Z_SIZE)),
        "wl":  n(ks[4], (HIDDEN // 4, Z_SIZE)),
        # decoder
        "wd1": n(ks[5], (Z_SIZE, HIDDEN // 4)),
        "wd2": n(ks[6], (HIDDEN // 4, HIDDEN // 2)),
        "wd3": n(ks[7], (HIDDEN // 2, HIDDEN)),
        "wd4": n(ks[8], (HIDDEN, INPUT_DIM)),
        # continuous decoder (Linear(continuous_dim, 67) + bias, then sigmoid)
        "wc":  n(ks[9], (CONTINUOUS_DIM, CONT_RAW_DIM)),
        "bc":  n(ks[10], (1, CONT_RAW_DIM)),
    }


def _reference_forward(x, eps, p):
    """Pure-JAX f32 reference mirroring the PyTorch forward (un-fused)."""
    relu = lambda v: jnp.maximum(v, 0.0)
    h = relu(x @ p["we1"])
    h = relu(h @ p["we2"])
    h = relu(h @ p["we3"])
    mu = h @ p["wm"]
    logvar = h @ p["wl"]
    z = mu + eps * jnp.exp(0.5 * logvar)
    d = relu(z @ p["wd1"])
    d = relu(d @ p["wd2"])
    d = relu(d @ p["wd3"])
    out = d @ p["wd4"]
    cont = jax.nn.sigmoid(out[..., CATEGORICAL_DIM:] @ p["wc"] + p["bc"])
    return out, cont, mu, logvar


if __name__ == "__main__":
    key = jax.random.PRNGKey(0)
    k_x, k_eps, k_w = jax.random.split(key, 3)

    # x is the already-embedded input (see IDSVAE.forward) of shape (B, input_dim)
    x = jax.random.normal(k_x, (BATCH, INPUT_DIM), jnp.float32)
    # eps plays the role of torch.randn_like(std) in reparameterize
    eps = jax.random.normal(k_eps, (BATCH, Z_SIZE), jnp.float32)
    params = _init_params(k_w)

    (sip, dip, sport, dport, proto, cont), mu, logvar = jax.block_until_ready(
        idsvae_forward(x, eps, params)
    )

    # correctness check against the pure-JAX f32 reference
    # (tolerances account for bf16 weights/activations on the MXU)
    out_ref, cont_ref, mu_ref, logvar_ref = _reference_forward(x, eps, params)
    tol = dict(rtol=2e-2, atol=2e-2)
    np.testing.assert_allclose(np.asarray(mu), np.asarray(mu_ref), **tol)
    np.testing.assert_allclose(np.asarray(logvar), np.asarray(logvar_ref), **tol)
    np.testing.assert_allclose(np.asarray(cont), np.asarray(cont_ref), **tol)
    full_cat = np.concatenate([np.asarray(sip), np.asarray(dip), np.asarray(sport),
                               np.asarray(dport), np.asarray(proto)], axis=-1)
    np.testing.assert_allclose(full_cat, np.asarray(out_ref[..., :CATEGORICAL_DIM]), **tol)

    assert sip.shape == (BATCH, IP_DIM)
    assert dip.shape == (BATCH, IP_DIM)
    assert sport.shape == (BATCH, PORT_DIM)
    assert dport.shape == (BATCH, PORT_DIM)
    assert proto.shape == (BATCH, PROTOCOL_DIM)
    assert cont.shape == (BATCH, CONT_RAW_DIM)
    assert mu.shape == (BATCH, Z_SIZE) and logvar.shape == (BATCH, Z_SIZE)

    print("KERNEL_OK")
</pallas_src>

<mosaic_0001>
module attributes {stable_mosaic.version = 11 : i64} {
  func.func @_idsvae_kernel(%arg0: i32, %arg1: memref<2x58xbf16, #tpu.memory_space<vmem>>, %arg2: memref<2x8xf32, #tpu.memory_space<vmem>>, %arg3: memref<58x64xbf16, #tpu.memory_space<vmem>>, %arg4: memref<64x32xbf16, #tpu.memory_space<vmem>>, %arg5: memref<32x16xbf16, #tpu.memory_space<vmem>>, %arg6: memref<16x16xbf16, #tpu.memory_space<vmem>>, %arg7: memref<8x16xbf16, #tpu.memory_space<vmem>>, %arg8: memref<16x32xbf16, #tpu.memory_space<vmem>>, %arg9: memref<32x64xbf16, #tpu.memory_space<vmem>>, %arg10: memref<64x58xbf16, #tpu.memory_space<vmem>>, %arg11: memref<64x67xbf16, #tpu.memory_space<vmem>>, %arg12: memref<1x67xf32, #tpu.memory_space<vmem>>, %arg13: memref<2x256xf32, #tpu.memory_space<vmem>>) attributes {dimension_semantics = [#tpu.dimension_semantics<parallel>], iteration_bounds = array<i64: 1>, scalar_prefetch = 0 : i64, scratch_operands = 0 : i64, tpu.core_type = #tpu.core_type<tc>, window_params = [{transform_indices = @transform_0, window_bounds = array<i64: 2, 58>}, {transform_indices = @transform_1, window_bounds = array<i64: 2, 8>}, {pipeline_mode = #tpu.pipeline_mode<synchronous>, transform_indices = @transform_2, window_bounds = array<i64: 58, 64>}, {pipeline_mode = #tpu.pipeline_mode<synchronous>, transform_indices = @transform_3, window_bounds = array<i64: 64, 32>}, {pipeline_mode = #tpu.pipeline_mode<synchronous>, transform_indices = @transform_4, window_bounds = array<i64: 32, 16>}, {pipeline_mode = #tpu.pipeline_mode<synchronous>, transform_indices = @transform_5, window_bounds = array<i64: 16, 16>}, {pipeline_mode = #tpu.pipeline_mode<synchronous>, transform_indices = @transform_6, window_bounds = array<i64: 8, 16>}, {pipeline_mode = #tpu.pipeline_mode<synchronous>, transform_indices = @transform_7, window_bounds = array<i64: 16, 32>}, {pipeline_mode = #tpu.pipeline_mode<synchronous>, transform_indices = @transform_8, window_bounds = array<i64: 32, 64>}, {pipeline_mode = #tpu.pipeline_mode<synchronous>, transform_indices = @transform_9, window_bounds = array<i64: 64, 58>}, {pipeline_mode = #tpu.pipeline_mode<synchronous>, transform_indices = @transform_10, window_bounds = array<i64: 64, 67>}, {pipeline_mode = #tpu.pipeline_mode<synchronous>, transform_indices = @transform_11, window_bounds = array<i64: 1, 67>}, {transform_indices = @transform_12, window_bounds = array<i64: 2, 256>}]} {
    %c0 = arith.constant 0 : index
    %c0_0 = arith.constant 0 : index
    %0 = vector.load %arg1[%c0, %c0_0] : memref<2x58xbf16, #tpu.memory_space<vmem>>, vector<2x58xbf16>
    %c0_1 = arith.constant 0 : index
    %c0_2 = arith.constant 0 : index
    %1 = vector.load %arg3[%c0_1, %c0_2] : memref<58x64xbf16, #tpu.memory_space<vmem>>, vector<58x64xbf16>
    %cst = arith.constant dense<0.000000e+00> : vector<2x64xf32>
    %2 = tpu.matmul %0, %1, %cst {dimension_numbers = #tpu.dot_dimension_numbers<[1], [0], [0], [1], [0, 0, 1, 1], [], []>} : vector<2x58xbf16>, vector<58x64xbf16>, vector<2x64xf32> -> vector<2x64xf32>
    %cst_3 = arith.constant 0.000000e+00 : f32
    %3 = vector.broadcast %cst_3 : f32 to vector<2x64xf32>
    %4 = arith.maximumf %2, %3 : vector<2x64xf32>
    %5 = arith.truncf %4 : vector<2x64xf32> to vector<2x64xbf16>
    %c0_4 = arith.constant 0 : index
    %c0_5 = arith.constant 0 : index
    %6 = vector.load %arg4[%c0_4, %c0_5] : memref<64x32xbf16, #tpu.memory_space<vmem>>, vector<64x32xbf16>
    %cst_6 = arith.constant dense<0.000000e+00> : vector<2x32xf32>
    %7 = tpu.matmul %5, %6, %cst_6 {dimension_numbers = #tpu.dot_dimension_numbers<[1], [0], [0], [1], [0, 0, 1, 1], [], []>} : vector<2x64xbf16>, vector<64x32xbf16>, vector<2x32xf32> -> vector<2x32xf32>
    %cst_7 = arith.constant 0.000000e+00 : f32
    %8 = vector.broadcast %cst_7 : f32 to vector<2x32xf32>
    %9 = arith.maximumf %7, %8 : vector<2x32xf32>
    %10 = arith.truncf %9 : vector<2x32xf32> to vector<2x32xbf16>
    %c0_8 = arith.constant 0 : index
    %c0_9 = arith.constant 0 : index
    %11 = vector.load %arg5[%c0_8, %c0_9] : memref<32x16xbf16, #tpu.memory_space<vmem>>, vector<32x16xbf16>
    %cst_10 = arith.constant dense<0.000000e+00> : vector<2x16xf32>
    %12 = tpu.matmul %10, %11, %cst_10 {dimension_numbers = #tpu.dot_dimension_numbers<[1], [0], [0], [1], [0, 0, 1, 1], [], []>} : vector<2x32xbf16>, vector<32x16xbf16>, vector<2x16xf32> -> vector<2x16xf32>
    %cst_11 = arith.constant 0.000000e+00 : f32
    %13 = vector.broadcast %cst_11 : f32 to vector<2x16xf32>
    %14 = arith.maximumf %12, %13 : vector<2x16xf32>
    %15 = arith.truncf %14 : vector<2x16xf32> to vector<2x16xbf16>
    %c0_12 = arith.constant 0 : index
    %c0_13 = arith.constant 0 : index
    %16 = vector.load %arg6[%c0_12, %c0_13] : memref<16x16xbf16, #tpu.memory_space<vmem>>, vector<16x16xbf16>
    %cst_14 = arith.constant dense<0.000000e+00> : vector<2x16xf32>
    %17 = tpu.matmul %15, %16, %cst_14 {dimension_numbers = #tpu.dot_dimension_numbers<[1], [0], [0], [1], [0, 0, 1, 1], [], []>} : vector<2x16xbf16>, vector<16x16xbf16>, vector<2x16xf32> -> vector<2x16xf32>
    %18 = vector.extract_strided_slice %17 {offsets = [0, 0], sizes = [2, 8], strides = [1, 1]} : vector<2x16xf32> to vector<2x8xf32>
    %19 = vector.extract_strided_slice %17 {offsets = [0, 8], sizes = [2, 8], strides = [1, 1]} : vector<2x16xf32> to vector<2x8xf32>
    %c0_15 = arith.constant 0 : index
    %c0_16 = arith.constant 0 : index
    %20 = vector.load %arg2[%c0_15, %c0_16] : memref<2x8xf32, #tpu.memory_space<vmem>>, vector<2x8xf32>
    %cst_17 = arith.constant 5.000000e-01 : f32
    %21 = vector.broadcast %cst_17 : f32 to vector<2x8xf32>
    %22 = arith.mulf %21, %19 : vector<2x8xf32>
    %23 = math.exp %22 : vector<2x8xf32>
    %24 = arith.mulf %20, %23 : vector<2x8xf32>
    %25 = arith.addf %18, %24 : vector<2x8xf32>
    %26 = arith.truncf %25 : vector<2x8xf32> to vector<2x8xbf16>
    %c0_18 = arith.constant 0 : index
    %c0_19 = arith.constant 0 : index
    %27 = vector.load %arg7[%c0_18, %c0_19] : memref<8x16xbf16, #tpu.memory_space<vmem>>, vector<8x16xbf16>
    %cst_20 = arith.constant dense<0.000000e+00> : vector<2x16xf32>
    %28 = tpu.matmul %26, %27, %cst_20 {dimension_numbers = #tpu.dot_dimension_numbers<[1], [0], [0], [1], [0, 0, 1, 1], [], []>} : vector<2x8xbf16>, vector<8x16xbf16>, vector<2x16xf32> -> vector<2x16xf32>
    %cst_21 = arith.constant 0.000000e+00 : f32
    %29 = vector.broadcast %cst_21 : f32 to vector<2x16xf32>
    %30 = arith.maximumf %28, %29 : vector<2x16xf32>
    %31 = arith.truncf %30 : vector<2x16xf32> to vector<2x16xbf16>
    %c0_22 = arith.constant 0 : index
    %c0_23 = arith.constant 0 : index
    %32 = vector.load %arg8[%c0_22, %c0_23] : memref<16x32xbf16, #tpu.memory_space<vmem>>, vector<16x32xbf16>
    %cst_24 = arith.constant dense<0.000000e+00> : vector<2x32xf32>
    %33 = tpu.matmul %31, %32, %cst_24 {dimension_numbers = #tpu.dot_dimension_numbers<[1], [0], [0], [1], [0, 0, 1, 1], [], []>} : vector<2x16xbf16>, vector<16x32xbf16>, vector<2x32xf32> -> vector<2x32xf32>
    %cst_25 = arith.constant 0.000000e+00 : f32
    %34 = vector.broadcast %cst_25 : f32 to vector<2x32xf32>
    %35 = arith.maximumf %33, %34 : vector<2x32xf32>
    %36 = arith.truncf %35 : vector<2x32xf32> to vector<2x32xbf16>
    %c0_26 = arith.constant 0 : index
    %c0_27 = arith.constant 0 : index
    %37 = vector.load %arg9[%c0_26, %c0_27] : memref<32x64xbf16, #tpu.memory_space<vmem>>, vector<32x64xbf16>
    %cst_28 = arith.constant dense<0.000000e+00> : vector<2x64xf32>
    %38 = tpu.matmul %36, %37, %cst_28 {dimension_numbers = #tpu.dot_dimension_numbers<[1], [0], [0], [1], [0, 0, 1, 1], [], []>} : vector<2x32xbf16>, vector<32x64xbf16>, vector<2x64xf32> -> vector<2x64xf32>
    %cst_29 = arith.constant 0.000000e+00 : f32
    %39 = vector.broadcast %cst_29 : f32 to vector<2x64xf32>
    %40 = arith.maximumf %38, %39 : vector<2x64xf32>
    %41 = arith.truncf %40 : vector<2x64xf32> to vector<2x64xbf16>
    %c0_30 = arith.constant 0 : index
    %c0_31 = arith.constant 0 : index
    %42 = vector.load %arg10[%c0_30, %c0_31] : memref<64x58xbf16, #tpu.memory_space<vmem>>, vector<64x58xbf16>
    %cst_32 = arith.constant dense<0.000000e+00> : vector<2x58xf32>
    %43 = tpu.matmul %41, %42, %cst_32 {dimension_numbers = #tpu.dot_dimension_numbers<[1], [0], [0], [1], [0, 0, 1, 1], [], []>} : vector<2x64xbf16>, vector<64x58xbf16>, vector<2x58xf32> -> vector<2x58xf32>
    %c0_33 = arith.constant 0 : index
    %c0_34 = arith.constant 0 : index
    %44 = vector.load %arg11[%c0_33, %c0_34] : memref<64x67xbf16, #tpu.memory_space<vmem>>, vector<64x67xbf16>
    %cst_35 = arith.constant dense<0.000000e+00> : vector<2x67xf32>
    %45 = tpu.matmul %41, %44, %cst_35 {dimension_numbers = #tpu.dot_dimension_numbers<[1], [0], [0], [1], [0, 0, 1, 1], [], []>} : vector<2x64xbf16>, vector<64x67xbf16>, vector<2x67xf32> -> vector<2x67xf32>
    %c0_36 = arith.constant 0 : index
    %c0_37 = arith.constant 0 : index
    %46 = vector.load %arg12[%c0_36, %c0_37] : memref<1x67xf32, #tpu.memory_space<vmem>>, vector<1x67xf32>
    %47 = vector.broadcast %46 : vector<1x67xf32> to vector<2x67xf32>
    %48 = arith.addf %45, %47 : vector<2x67xf32>
    %49 = arith.negf %48 : vector<2x67xf32>
    %50 = math.exp %49 : vector<2x67xf32>
    %cst_38 = arith.constant 1.000000e+00 : f32
    %51 = vector.broadcast %cst_38 : f32 to vector<2x67xf32>
    %52 = arith.addf %51, %50 : vector<2x67xf32>
    %53 = arith.divf %51, %52 : vector<2x67xf32>
    %cst_39 = arith.constant 0.000000e+00 : f32
    %54 = vector.broadcast %cst_39 : f32 to vector<2x115xf32>
    %55 = tpu.concatenate %43, %53, %17, %54 in 1 : vector<2x58xf32>, vector<2x67xf32>, vector<2x16xf32>, vector<2x115xf32> -> vector<2x256xf32>
    %c0_40 = arith.constant 0 : index
    %c0_41 = arith.constant 0 : index
    %56 = vector.load %arg13[%c0_40, %c0_41] : memref<2x256xf32, #tpu.memory_space<vmem>>, vector<2x256xf32>
    tpu.vector_store %arg13[%c0_40, %c0_41], %55 {strides = array<i32>} : memref<2x256xf32, #tpu.memory_space<vmem>>, vector<2x256xf32>,
    return
  }
  func.func @transform_0(%arg0: i32) -> (i32, i32) {
    %c0_i32 = arith.constant 0 : i32
    %c0_i32_0 = arith.constant 0 : i32
    return %arg0, %c0_i32 : i32, i32
  }
  func.func @transform_1(%arg0: i32) -> (i32, i32) {
    %c0_i32 = arith.constant 0 : i32
    %c0_i32_0 = arith.constant 0 : i32
    return %arg0, %c0_i32 : i32, i32
  }
  func.func @transform_2(%arg0: i32) -> (i32, i32) {
    %c0_i32 = arith.constant 0 : i32
    %c0_i32_0 = arith.constant 0 : i32
    %c0_i32_1 = arith.constant 0 : i32
    return %c0_i32, %c0_i32_0 : i32, i32
  }
  func.func @transform_3(%arg0: i32) -> (i32, i32) {
    %c0_i32 = arith.constant 0 : i32
    %c0_i32_0 = arith.constant 0 : i32
    %c0_i32_1 = arith.constant 0 : i32
    return %c0_i32, %c0_i32_0 : i32, i32
  }
  func.func @transform_4(%arg0: i32) -> (i32, i32) {
    %c0_i32 = arith.constant 0 : i32
    %c0_i32_0 = arith.constant 0 : i32
    %c0_i32_1 = arith.constant 0 : i32
    return %c0_i32, %c0_i32_0 : i32, i32
  }
  func.func @transform_5(%arg0: i32) -> (i32, i32) {
    %c0_i32 = arith.constant 0 : i32
    %c0_i32_0 = arith.constant 0 : i32
    %c0_i32_1 = arith.constant 0 : i32
    return %c0_i32, %c0_i32_0 : i32, i32
  }
  func.func @transform_6(%arg0: i32) -> (i32, i32) {
    %c0_i32 = arith.constant 0 : i32
    %c0_i32_0 = arith.constant 0 : i32
    %c0_i32_1 = arith.constant 0 : i32
    return %c0_i32, %c0_i32_0 : i32, i32
  }
  func.func @transform_7(%arg0: i32) -> (i32, i32) {
    %c0_i32 = arith.constant 0 : i32
    %c0_i32_0 = arith.constant 0 : i32
    %c0_i32_1 = arith.constant 0 : i32
    return %c0_i32, %c0_i32_0 : i32, i32
  }
  func.func @transform_8(%arg0: i32) -> (i32, i32) {
    %c0_i32 = arith.constant 0 : i32
    %c0_i32_0 = arith.constant 0 : i32
    %c0_i32_1 = arith.constant 0 : i32
    return %c0_i32, %c0_i32_0 : i32, i32
  }
  func.func @transform_9(%arg0: i32) -> (i32, i32) {
    %c0_i32 = arith.constant 0 : i32
    %c0_i32_0 = arith.constant 0 : i32
    %c0_i32_1 = arith.constant 0 : i32
    return %c0_i32, %c0_i32_0 : i32, i32
  }
  func.func @transform_10(%arg0: i32) -> (i32, i32) {
    %c0_i32 = arith.constant 0 : i32
    %c0_i32_0 = arith.constant 0 : i32
    %c0_i32_1 = arith.constant 0 : i32
    return %c0_i32, %c0_i32_0 : i32, i32
  }
  func.func @transform_11(%arg0: i32) -> (i32, i32) {
    %c0_i32 = arith.constant 0 : i32
    %c0_i32_0 = arith.constant 0 : i32
    %c0_i32_1 = arith.constant 0 : i32
    return %c0_i32, %c0_i32_0 : i32, i32
  }
  func.func @transform_12(%arg0: i32) -> (i32, i32) {
    %c0_i32 = arith.constant 0 : i32
    %c0_i32_0 = arith.constant 0 : i32
    return %arg0, %c0_i32 : i32, i32
  }
}

</mosaic_0001>

<llo_original>
// kernel: idsvae_forward.1
$region0: #{idsvae_forward.1}
  #allocation0 [shape = 'u32[]', space=smem, size = 0x4, offset = 0x4, fixed_abs, tag = 'smem constant byte address 0x4 - core index']
  #allocation1 [shape = 'u32[144,128]{1,0:T(1,128)}', space=vmem, size = 0x12000, scoped, tag = 'internal scratch']
  %s0 = inlined_call_operand.vmem [shape: bf16[2,58], index: 0, kind: input, shape index: {}]
  %s1 = inlined_call_operand.vmem [shape: f32[2,8], index: 1, kind: input, shape index: {}]
  %s2 = inlined_call_operand.vmem [shape: bf16[58,64], index: 2, kind: input, shape index: {}]
  %s3 = inlined_call_operand.vmem [shape: bf16[64,32], index: 3, kind: input, shape index: {}]
  %s4 = inlined_call_operand.vmem [shape: bf16[32,16], index: 4, kind: input, shape index: {}]
  %s5 = inlined_call_operand.vmem [shape: bf16[16,16], index: 5, kind: input, shape index: {}]
  %s6 = inlined_call_operand.vmem [shape: bf16[8,16], index: 6, kind: input, shape index: {}]
  %s7 = inlined_call_operand.vmem [shape: bf16[16,32], index: 7, kind: input, shape index: {}]
  %s8 = inlined_call_operand.vmem [shape: bf16[32,64], index: 8, kind: input, shape index: {}]
  %s9 = inlined_call_operand.vmem [shape: bf16[64,58], index: 9, kind: input, shape index: {}]
  %s10 = inlined_call_operand.vmem [shape: bf16[64,67], index: 10, kind: input, shape index: {}]
  %s11 = inlined_call_operand.vmem [shape: f32[1,67], index: 11, kind: input, shape index: {}]
  %s12 = inlined_call_operand.vmem [shape: f32[2,256], index: 12, kind: output, shape index: {}]
  %s13 = sld [smem:[#allocation0]]
  $region58: #{idsvae_forward.1} parent=0
    _
  %s15 = ssub.s32 1, %s13
  %s16 = scalar_select 0, %s15, %s13
  // Predicated region
  $region2: #{idsvae_forward.1} parent=0 // pred_check
    _
  $region3: #{idsvae_forward.1} parent=0 // pred_check_branch
    %18 = sbr.rel (0) target = $region5
  $region4: #{idsvae_forward.1} parent=0 // pred_region
    _
  $region5: #{idsvae_forward.1} parent=0 // pred_fallthru
    _
  // Predicated region
  $region6: #{idsvae_forward.1} parent=0 // pred_check
    _
  $region7: #{idsvae_forward.1} parent=0 // pred_check_branch
    %20 = sbr.rel (0) target = $region9
  $region8: #{idsvae_forward.1} parent=0 // pred_region
    _
  $region9: #{idsvae_forward.1} parent=0 // pred_fallthru
    _
  // Predicated region
  $region10: #{idsvae_forward.1} parent=0 // pred_check
    _
  $region11: #{idsvae_forward.1} parent=0 // pred_check_branch
    %22 = sbr.rel (0) target = $region13
  $region12: #{idsvae_forward.1} parent=0 // pred_region
    _
  $region13: #{idsvae_forward.1} parent=0 // pred_fallthru
    _
  // Predicated region
  $region14: #{idsvae_forward.1} parent=0 // pred_check
    _
  $region15: #{idsvae_forward.1} parent=0 // pred_check_branch
    %24 = sbr.rel (0) target = $region17
  $region16: #{idsvae_forward.1} parent=0 // pred_region
    _
  $region17: #{idsvae_forward.1} parent=0 // pred_fallthru
    _
  // Predicated region
  $region18: #{idsvae_forward.1} parent=0 // pred_check
    _
  $region19: #{idsvae_forward.1} parent=0 // pred_check_branch
    %26 = sbr.rel (0) target = $region21
  $region20: #{idsvae_forward.1} parent=0 // pred_region
    _
  $region21: #{idsvae_forward.1} parent=0 // pred_fallthru
    _
  // Predicated region
  $region22: #{idsvae_forward.1} parent=0 // pred_check
    _
  $region23: #{idsvae_forward.1} parent=0 // pred_check_branch
    %28 = sbr.rel (0) target = $region25
  $region24: #{idsvae_forward.1} parent=0 // pred_region
    _
  $region25: #{idsvae_forward.1} parent=0 // pred_fallthru
    _
  // Predicated region
  $region26: #{idsvae_forward.1} parent=0 // pred_check
    _
  $region27: #{idsvae_forward.1} parent=0 // pred_check_branch
    %30 = sbr.rel (0) target = $region29
  $region28: #{idsvae_forward.1} parent=0 // pred_region
    _
  $region29: #{idsvae_forward.1} parent=0 // pred_fallthru
    _
  // Predicated region
  $region30: #{idsvae_forward.1} parent=0 // pred_check
    _
  $region31: #{idsvae_forward.1} parent=0 // pred_check_branch
    %32 = sbr.rel (0) target = $region33
  $region32: #{idsvae_forward.1} parent=0 // pred_region
    _
  $region33: #{idsvae_forward.1} parent=0 // pred_fallthru
    _
  // Predicated region
  $region34: #{idsvae_forward.1} parent=0 // pred_check
    _
  $region35: #{idsvae_forward.1} parent=0 // pred_check_branch
    %34 = sbr.rel (0) target = $region37
  $region36: #{idsvae_forward.1} parent=0 // pred_region
    _
  $region37: #{idsvae_forward.1} parent=0 // pred_fallthru
    _
  // Predicated region
  $region38: #{idsvae_forward.1} parent=0 // pred_check
    _
  $region39: #{idsvae_forward.1} parent=0 // pred_check_branch
    %36 = sbr.rel (0) target = $region41
  $region40: #{idsvae_forward.1} parent=0 // pred_region
    _
  $region41: #{idsvae_forward.1} parent=0 // pred_fallthru
    _
  // Predicated region
  $region42: #{idsvae_forward.1} parent=0 // pred_check
    _
  $region43: #{idsvae_forward.1} parent=0 // pred_check_branch
    %38 = sbr.rel (0) target = $region45
  $region44: #{idsvae_forward.1} parent=0 // pred_region
    _
  $region45: #{idsvae_forward.1} parent=0 // pred_fallthru
    _
  // Predicated region
  $region46: #{idsvae_forward.1} parent=0 // pred_check
    _
  $region47: #{idsvae_forward.1} parent=0 // pred_check_branch
    %40 = sbr.rel (0) target = $region49
  $region48: #{idsvae_forward.1} parent=0 // pred_region
    _
  $region49: #{idsvae_forward.1} parent=0 // pred_fallthru
    _
  %v42 = vld [vmem:[%s0] sm:$0x1]
  %v43 = vld [vmem:[%s2] sm:$0xf]
  %v44 = vld [vmem:[%s2 + $0x4] sm:$0xf]
  %v45 = vld [vmem:[%s2 + $0x8] sm:$0xf]
  %v46 = vld [vmem:[%s2 + $0xc] sm:$0xf]
  %v47 = vld [vmem:[%s2 + $0x10] sm:$0xf]
  %v48 = vld [vmem:[%s2 + $0x14] sm:$0xf]
  %v49 = vld [vmem:[%s2 + $0x18] sm:$0xf]
  %v50 = vld [vmem:[%s2 + $0x1c] sm:$0x1]
  %v59 = vunpack.c.l.b16 %v43
  %v60 = vunpack.c.l.b16 %v44
  %v61 = vunpack.c.l.b16 %v45
  %v62 = vunpack.c.l.b16 %v46
  %v63 = vunpack.c.l.b16 %v47
  %v64 = vunpack.c.l.b16 %v48
  %v65 = vunpack.c.l.b16 %v49
  %v66 = vunpack.c.l.b16 %v50
  %v67 = vpack.c.b16 %v60, %v59
  %v68 = vpack.c.b16 %v62, %v61
  %v69 = vpack.c.b16 %v64, %v63
  %v70 = vpack.c.b16 %v66, %v65
  %vm74 = vcmask 474112
  %v76 = vsel %vm74, %v42, 0
  %vm78 = vcmask 1044480
  %v80 = vsel %vm78, %v70, 0
  %82 = vmatprep.subr.bf16.mxu0 0
  %83 = vmatpush1.bf16.msra.mxu0 %v67
  %84 = vmatprep.subr.bf16.mxu0 0
  %85 = vmatpush1.bf16.msra.mxu0 %v68
  %86 = vmatprep.subr.bf16.mxu0 0
  %87 = vmatpush1.bf16.msra.mxu0 %v69
  %88 = vmatprep.subr.bf16.mxu0 0
  %89 = vmatpush1.bf16.msra.mxu0 %v80
  %90 = vmatprep.subr.bf16.mxu0 0
  %91 = vmatpush1.bf16.msra.mxu0 0
  %92 = vmatprep.subr.bf16.mxu0 0
  %93 = vmatpush1.bf16.msra.mxu0 0
  %94 = vmatprep.subr.bf16.mxu0 0
  %95 = vmatpush1.bf16.msra.mxu0 0
  %96 = vmatprep.subr.bf16.mxu0 0
  %97 = vmatpush1.bf16.msra.mxu0 0
  %98 = vmatprep.subr.bf16.mxu0 0
  %99 = vmatpush1.bf16.msra.mxu0 0
  %100 = vmatprep.subr.bf16.mxu0 0
  %101 = vmatpush1.bf16.msra.mxu0 0
  %102 = vmatprep.subr.bf16.mxu0 0
  %103 = vmatpush1.bf16.msra.mxu0 0
  %104 = vmatprep.subr.bf16.mxu0 0
  %105 = vmatpush1.bf16.msra.mxu0 0
  %106 = vmatprep.subr.bf16.mxu0 0
  %107 = vmatpush1.bf16.msra.mxu0 0
  %108 = vmatprep.subr.bf16.mxu0 0
  %109 = vmatpush1.bf16.msra.mxu0 0
  %110 = vmatprep.subr.bf16.mxu0 0
  %111 = vmatpush1.bf16.msra.mxu0 0
  %112 = vmatprep.subr.bf16.mxu0 0
  %113 = vmatpush1.bf16.msra.mxu0 0
  %114 = vmatprep.mubr.bf16.mxu0 0
  %115 = vmatmul.mubr.bf16.gmra.mrb[0].mxu0 %v76
  %v116 = vpop.f32.mrb[0].mxu0
  %v117 = vadd.f32 0.0, %v116
  %v118 = vpop.f32.mrb[0].mxu0
  %v119 = vpop.f32.mrb[0].mxu0
  %v120 = vpop.f32.mrb[0].mxu0
  %121 = vdwg.mxu0
  %v122 = vmax.f32 %v117, 0.0
  %v123 = vpack.c.bf16 %v122, %v122
  %v124 = vld [vmem:[%s3] sm:$0xf]
  %v125 = vld [vmem:[%s3 + $0x4] sm:$0xf]
  %v126 = vld [vmem:[%s3 + $0x8] sm:$0xf]
  %v127 = vld [vmem:[%s3 + $0xc] sm:$0xf]
  %v128 = vld [vmem:[%s3 + $0x10] sm:$0xf]
  %v129 = vld [vmem:[%s3 + $0x14] sm:$0xf]
  %v130 = vld [vmem:[%s3 + $0x18] sm:$0xf]
  %v131 = vld [vmem:[%s3 + $0x1c] sm:$0xf]
  %v140 = vunpack.c.l.b16 %v124
  %v141 = vunpack.c.l.b16 %v125
  %v142 = vunpack.c.l.b16 %v126
  %v143 = vunpack.c.l.b16 %v127
  %v144 = vunpack.c.l.b16 %v128
  %v145 = vunpack.c.l.b16 %v129
  %v146 = vunpack.c.l.b16 %v130
  %v147 = vunpack.c.l.b16 %v131
  %v148 = vpack.c.b16 %v141, %v140
  %v149 = vpack.c.b16 %v143, %v142
  %v150 = vpack.c.b16 %v145, %v144
  %v151 = vpack.c.b16 %v147, %v146
  %vm156 = vcmask 523264
  %v158 = vsel %vm156, %v123, 0
  %160 = vmatprep.subr.bf16.mxu0 0
  %161 = vmatpush1.bf16.msra.mxu0 %v148
  %162 = vmatprep.subr.bf16.mxu0 0
  %163 = vmatpush1.bf16.msra.mxu0 %v149
  %164 = vmatprep.subr.bf16.mxu0 0
  %165 = vmatpush1.bf16.msra.mxu0 %v150
  %166 = vmatprep.subr.bf16.mxu0 0
  %167 = vmatpush1.bf16.msra.mxu0 %v151
  %168 = vmatprep.subr.bf16.mxu0 0
  %169 = vmatpush1.bf16.msra.mxu0 0
  %170 = vmatprep.subr.bf16.mxu0 0
  %171 = vmatpush1.bf16.msra.mxu0 0
  %172 = vmatprep.subr.bf16.mxu0 0
  %173 = vmatpush1.bf16.msra.mxu0 0
  %174 = vmatprep.subr.bf16.mxu0 0
  %175 = vmatpush1.bf16.msra.mxu0 0
  %176 = vmatprep.subr.bf16.mxu0 0
  %177 = vmatpush1.bf16.msra.mxu0 0
  %178 = vmatprep.subr.bf16.mxu0 0
  %179 = vmatpush1.bf16.msra.mxu0 0
  %180 = vmatprep.subr.bf16.mxu0 0
  %181 = vmatpush1.bf16.msra.mxu0 0
  %182 = vmatprep.subr.bf16.mxu0 0
  %183 = vmatpush1.bf16.msra.mxu0 0
  %184 = vmatprep.subr.bf16.mxu0 0
  %185 = vmatpush1.bf16.msra.mxu0 0
  %186 = vmatprep.subr.bf16.mxu0 0
  %187 = vmatpush1.bf16.msra.mxu0 0
  %188 = vmatprep.subr.bf16.mxu0 0
  %189 = vmatpush1.bf16.msra.mxu0 0
  %190 = vmatprep.subr.bf16.mxu0 0
  %191 = vmatpush1.bf16.msra.mxu0 0
  %192 = vmatprep.mubr.bf16.mxu0 0
  %193 = vmatmul.mubr.bf16.gmra.mrb[0].mxu0 %v158
  %v194 = vpop.f32.mrb[0].mxu0
  %v195 = vadd.f32 0.0, %v194
  %v196 = vpop.f32.mrb[0].mxu0
  %v197 = vpop.f32.mrb[0].mxu0
  %v198 = vpop.f32.mrb[0].mxu0
  %199 = vdwg.mxu0
  %v200 = vmax.f32 %v195, 0.0
  %v201 = vpack.c.bf16 %v200, %v200
  %v202 = vld [vmem:[%s4] sm:$0xf]
  %v203 = vld [vmem:[%s4 + $0x4] sm:$0xf]
  %v204 = vld [vmem:[%s4 + $0x8] sm:$0xf]
  %v205 = vld [vmem:[%s4 + $0xc] sm:$0xf]
  %v210 = vunpack.c.l.b16 %v202
  %v211 = vunpack.c.l.b16 %v203
  %v212 = vunpack.c.l.b16 %v204
  %v213 = vunpack.c.l.b16 %v205
  %v214 = vpack.c.b16 %v211, %v210
  %v215 = vpack.c.b16 %v213, %v212
  %vm218 = vcmask 261120
  %v220 = vsel %vm218, %v201, 0
  %222 = vmatprep.subr.bf16.mxu0 0
  %223 = vmatpush1.bf16.msra.mxu0 %v214
  %224 = vmatprep.subr.bf16.mxu0 0
  %225 = vmatpush1.bf16.msra.mxu0 %v215
  %226 = vmatprep.subr.bf16.mxu0 0
  %227 = vmatpush1.bf16.msra.mxu0 0
  %228 = vmatprep.subr.bf16.mxu0 0
  %229 = vmatpush1.bf16.msra.mxu0 0
  %230 = vmatprep.subr.bf16.mxu0 0
  %231 = vmatpush1.bf16.msra.mxu0 0
  %232 = vmatprep.subr.bf16.mxu0 0
  %233 = vmatpush1.bf16.msra.mxu0 0
  %234 = vmatprep.subr.bf16.mxu0 0
  %235 = vmatpush1.bf16.msra.mxu0 0
  %236 = vmatprep.subr.bf16.mxu0 0
  %237 = vmatpush1.bf16.msra.mxu0 0
  %238 = vmatprep.subr.bf16.mxu0 0
  %239 = vmatpush1.bf16.msra.mxu0 0
  %240 = vmatprep.subr.bf16.mxu0 0
  %241 = vmatpush1.bf16.msra.mxu0 0
  %242 = vmatprep.subr.bf16.mxu0 0
  %243 = vmatpush1.bf16.msra.mxu0 0
  %244 = vmatprep.subr.bf16.mxu0 0
  %245 = vmatpush1.bf16.msra.mxu0 0
  %246 = vmatprep.subr.bf16.mxu0 0
  %247 = vmatpush1.bf16.msra.mxu0 0
  %248 = vmatprep.subr.bf16.mxu0 0
  %249 = vmatpush1.bf16.msra.mxu0 0
  %250 = vmatprep.subr.bf16.mxu0 0
  %251 = vmatpush1.bf16.msra.mxu0 0
  %252 = vmatprep.subr.bf16.mxu0 0
  %253 = vmatpush1.bf16.msra.mxu0 0
  %254 = vmatprep.mubr.bf16.mxu0 0
  %255 = vmatmul.mubr.bf16.gmra.mrb[0].mxu0 %v220
  %v256 = vpop.f32.mrb[0].mxu0
  %v257 = vadd.f32 0.0, %v256
  %v258 = vpop.f32.mrb[0].mxu0
  %v259 = vpop.f32.mrb[0].mxu0
  %v260 = vpop.f32.mrb[0].mxu0
  %261 = vdwg.mxu0
  %v262 = vmax.f32 %v257, 0.0
  %v263 = vpack.c.bf16 %v262, %v262
  %v264 = vld [vmem:[%s5] sm:$0xf]
  %v265 = vld [vmem:[%s5 + $0x4] sm:$0xf]
  %v268 = vunpack.c.l.b16 %v264
  %v269 = vunpack.c.l.b16 %v265
  %v270 = vpack.c.b16 %v269, %v268
  %vm272 = vcmask 130048
  %v274 = vsel %vm272, %v263, 0
  %276 = vmatprep.subr.bf16.mxu0 0
  %277 = vmatpush1.bf16.msra.mxu0 %v270
  %278 = vmatprep.subr.bf16.mxu0 0
  %279 = vmatpush1.bf16.msra.mxu0 0
  %280 = vmatprep.subr.bf16.mxu0 0
  %281 = vmatpush1.bf16.msra.mxu0 0
  %282 = vmatprep.subr.bf16.mxu0 0
  %283 = vmatpush1.bf16.msra.mxu0 0
  %284 = vmatprep.subr.bf16.mxu0 0
  %285 = vmatpush1.bf16.msra.mxu0 0
  %286 = vmatprep.subr.bf16.mxu0 0
  %287 = vmatpush1.bf16.msra.mxu0 0
  %288 = vmatprep.subr.bf16.mxu0 0
  %289 = vmatpush1.bf16.msra.mxu0 0
  %290 = vmatprep.subr.bf16.mxu0 0
  %291 = vmatpush1.bf16.msra.mxu0 0
  %292 = vmatprep.subr.bf16.mxu0 0
  %293 = vmatpush1.bf16.msra.mxu0 0
  %294 = vmatprep.subr.bf16.mxu0 0
  %295 = vmatpush1.bf16.msra.mxu0 0
  %296 = vmatprep.subr.bf16.mxu0 0
  %297 = vmatpush1.bf16.msra.mxu0 0
  %298 = vmatprep.subr.bf16.mxu0 0
  %299 = vmatpush1.bf16.msra.mxu0 0
  %300 = vmatprep.subr.bf16.mxu0 0
  %301 = vmatpush1.bf16.msra.mxu0 0
  %302 = vmatprep.subr.bf16.mxu0 0
  %303 = vmatpush1.bf16.msra.mxu0 0
  %304 = vmatprep.subr.bf16.mxu0 0
  %305 = vmatpush1.bf16.msra.mxu0 0
  %306 = vmatprep.subr.bf16.mxu0 0
  %307 = vmatpush1.bf16.msra.mxu0 0
  %308 = vmatprep.mubr.bf16.mxu0 0
  %309 = vmatmul.mubr.bf16.gmra.mrb[0].mxu0 %v274
  %v310 = vpop.f32.mrb[0].mxu0
  %v311 = vadd.f32 0.0, %v310
  %v312 = vpop.f32.mrb[0].mxu0
  %v313 = vpop.f32.mrb[0].mxu0
  %v314 = vpop.f32.mrb[0].mxu0
  %315 = vdwg.mxu0
  %v316 = vld [vmem:[%s1] sm:$0x3]
  %v317 = vmul.f32 %v311, 0.5
  %v318 = vmul.f32 %v317, 1.442695
  %v319 = vpow.pop %v318
  %321 = vrot.lane.b32.xlu0 %v319, 120
  %v322 = vpop.permute.xlu0 %321
  %v324 = vmul.f32 %v316, %v322
  %v325 = vadd.f32 %v311, %v324
  %v326 = vpack.c.bf16 %v325, %v325
  %v327 = vld [vmem:[%s6] sm:$0xf]
  %vm328 = vcmask 64512
  %v330 = vsel %vm328, %v326, 0
  %vm332 = vcmask 1043456
  %v334 = vsel %vm332, %v327, 0
  %336 = vmatprep.subr.bf16.mxu0 0
  %337 = vmatpush1.bf16.msra.mxu0 %v334
  %338 = vmatprep.subr.bf16.mxu0 0
  %339 = vmatpush1.bf16.msra.mxu0 0
  %340 = vmatprep.subr.bf16.mxu0 0
  %341 = vmatpush1.bf16.msra.mxu0 0
  %342 = vmatprep.subr.bf16.mxu0 0
  %343 = vmatpush1.bf16.msra.mxu0 0
  %344 = vmatprep.subr.bf16.mxu0 0
  %345 = vmatpush1.bf16.msra.mxu0 0
  %346 = vmatprep.subr.bf16.mxu0 0
  %347 = vmatpush1.bf16.msra.mxu0 0
  %348 = vmatprep.subr.bf16.mxu0 0
  %349 = vmatpush1.bf16.msra.mxu0 0
  %350 = vmatprep.subr.bf16.mxu0 0
  %351 = vmatpush1.bf16.msra.mxu0 0
  %352 = vmatprep.subr.bf16.mxu0 0
  %353 = vmatpush1.bf16.msra.mxu0 0
  %354 = vmatprep.subr.bf16.mxu0 0
  %355 = vmatpush1.bf16.msra.mxu0 0
  %356 = vmatprep.subr.bf16.mxu0 0
  %357 = vmatpush1.bf16.msra.mxu0 0
  %358 = vmatprep.subr.bf16.mxu0 0
  %359 = vmatpush1.bf16.msra.mxu0 0
  %360 = vmatprep.subr.bf16.mxu0 0
  %361 = vmatpush1.bf16.msra.mxu0 0
  %362 = vmatprep.subr.bf16.mxu0 0
  %363 = vmatpush1.bf16.msra.mxu0 0
  %364 = vmatprep.subr.bf16.mxu0 0
  %365 = vmatpush1.bf16.msra.mxu0 0
  %366 = vmatprep.subr.bf16.mxu0 0
  %367 = vmatpush1.bf16.msra.mxu0 0
  %368 = vmatprep.mubr.bf16.mxu0 0
  %369 = vmatmul.mubr.bf16.gmra.mrb[0].mxu0 %v330
  %v370 = vpop.f32.mrb[0].mxu0
  %v371 = vadd.f32 0.0, %v370
  %v372 = vpop.f32.mrb[0].mxu0
  %v373 = vpop.f32.mrb[0].mxu0
  %v374 = vpop.f32.mrb[0].mxu0
  %375 = vdwg.mxu0
  %v376 = vmax.f32 %v371, 0.0
  %v377 = vpack.c.bf16 %v376, %v376
  %v378 = vld [vmem:[%s7] sm:$0xf]
  %v379 = vld [vmem:[%s7 + $0x4] sm:$0xf]
  %v382 = vunpack.c.l.b16 %v378
  %v383 = vunpack.c.l.b16 %v379
  %v384 = vpack.c.b16 %v383, %v382
  %v387 = vsel %vm272, %v377, 0
  %389 = vmatprep.subr.bf16.mxu0 0
  %390 = vmatpush1.bf16.msra.mxu0 %v384
  %391 = vmatprep.subr.bf16.mxu0 0
  %392 = vmatpush1.bf16.msra.mxu0 0
  %393 = vmatprep.subr.bf16.mxu0 0
  %394 = vmatpush1.bf16.msra.mxu0 0
  %395 = vmatprep.subr.bf16.mxu0 0
  %396 = vmatpush1.bf16.msra.mxu0 0
  %397 = vmatprep.subr.bf16.mxu0 0
  %398 = vmatpush1.bf16.msra.mxu0 0
  %399 = vmatprep.subr.bf16.mxu0 0
  %400 = vmatpush1.bf16.msra.mxu0 0
  %401 = vmatprep.subr.bf16.mxu0 0
  %402 = vmatpush1.bf16.msra.mxu0 0
  %403 = vmatprep.subr.bf16.mxu0 0
  %404 = vmatpush1.bf16.msra.mxu0 0
  %405 = vmatprep.subr.bf16.mxu0 0
  %406 = vmatpush1.bf16.msra.mxu0 0
  %407 = vmatprep.subr.bf16.mxu0 0
  %408 = vmatpush1.bf16.msra.mxu0 0
  %409 = vmatprep.subr.bf16.mxu0 0
  %410 = vmatpush1.bf16.msra.mxu0 0
  %411 = vmatprep.subr.bf16.mxu0 0
  %412 = vmatpush1.bf16.msra.mxu0 0
  %413 = vmatprep.subr.bf16.mxu0 0
  %414 = vmatpush1.bf16.msra.mxu0 0
  %415 = vmatprep.subr.bf16.mxu0 0
  %416 = vmatpush1.bf16.msra.mxu0 0
  %417 = vmatprep.subr.bf16.mxu0 0
  %418 = vmatpush1.bf16.msra.mxu0 0
  %419 = vmatprep.subr.bf16.mxu0 0
  %420 = vmatpush1.bf16.msra.mxu0 0
  %421 = vmatprep.mubr.bf16.mxu0 0
  %422 = vmatmul.mubr.bf16.gmra.mrb[0].mxu0 %v387
  %v423 = vpop.f32.mrb[0].mxu0
  %v424 = vadd.f32 0.0, %v423
  %v425 = vpop.f32.mrb[0].mxu0
  %v426 = vpop.f32.mrb[0].mxu0
  %v427 = vpop.f32.mrb[0].mxu0
  %428 = vdwg.mxu0
  %v429 = vmax.f32 %v424, 0.0
  %v430 = vpack.c.bf16 %v429, %v429
  %v431 = vld [vmem:[%s8] sm:$0xf]
  %v432 = vld [vmem:[%s8 + $0x4] sm:$0xf]
  %v433 = vld [vmem:[%s8 + $0x8] sm:$0xf]
  %v434 = vld [vmem:[%s8 + $0xc] sm:$0xf]
  %v439 = vunpack.c.l.b16 %v431
  %v440 = vunpack.c.l.b16 %v432
  %v441 = vunpack.c.l.b16 %v433
  %v442 = vunpack.c.l.b16 %v434
  %v443 = vpack.c.b16 %v440, %v439
  %v444 = vpack.c.b16 %v442, %v441
  %v448 = vsel %vm218, %v430, 0
  %450 = vmatprep.subr.bf16.mxu0 0
  %451 = vmatpush1.bf16.msra.mxu0 %v443
  %452 = vmatprep.subr.bf16.mxu0 0
  %453 = vmatpush1.bf16.msra.mxu0 %v444
  %454 = vmatprep.subr.bf16.mxu0 0
  %455 = vmatpush1.bf16.msra.mxu0 0
  %456 = vmatprep.subr.bf16.mxu0 0
  %457 = vmatpush1.bf16.msra.mxu0 0
  %458 = vmatprep.subr.bf16.mxu0 0
  %459 = vmatpush1.bf16.msra.mxu0 0
  %460 = vmatprep.subr.bf16.mxu0 0
  %461 = vmatpush1.bf16.msra.mxu0 0
  %462 = vmatprep.subr.bf16.mxu0 0
  %463 = vmatpush1.bf16.msra.mxu0 0
  %464 = vmatprep.subr.bf16.mxu0 0
  %465 = vmatpush1.bf16.msra.mxu0 0
  %466 = vmatprep.subr.bf16.mxu0 0
  %467 = vmatpush1.bf16.msra.mxu0 0
  %468 = vmatprep.subr.bf16.mxu0 0
  %469 = vmatpush1.bf16.msra.mxu0 0
  %470 = vmatprep.subr.bf16.mxu0 0
  %471 = vmatpush1.bf16.msra.mxu0 0
  %472 = vmatprep.subr.bf16.mxu0 0
  %473 = vmatpush1.bf16.msra.mxu0 0
  %474 = vmatprep.subr.bf16.mxu0 0
  %475 = vmatpush1.bf16.msra.mxu0 0
  %476 = vmatprep.subr.bf16.mxu0 0
  %477 = vmatpush1.bf16.msra.mxu0 0
  %478 = vmatprep.subr.bf16.mxu0 0
  %479 = vmatpush1.bf16.msra.mxu0 0
  %480 = vmatprep.subr.bf16.mxu0 0
  %481 = vmatpush1.bf16.msra.mxu0 0
  %482 = vmatprep.mubr.bf16.mxu0 0
  %483 = vmatmul.mubr.bf16.gmra.mrb[0].mxu0 %v448
  %v484 = vpop.f32.mrb[0].mxu0
  %v485 = vadd.f32 0.0, %v484
  %v486 = vpop.f32.mrb[0].mxu0
  %v487 = vpop.f32.mrb[0].mxu0
  %v488 = vpop.f32.mrb[0].mxu0
  %489 = vdwg.mxu0
  %v490 = vmax.f32 %v485, 0.0
  %v491 = vpack.c.bf16 %v490, %v490
  %v492 = vld [vmem:[%s9] sm:$0xf]
  %v493 = vld [vmem:[%s9 + $0x4] sm:$0xf]
  %v494 = vld [vmem:[%s9 + $0x8] sm:$0xf]
  %v495 = vld [vmem:[%s9 + $0xc] sm:$0xf]
  %v496 = vld [vmem:[%s9 + $0x10] sm:$0xf]
  %v497 = vld [vmem:[%s9 + $0x14] sm:$0xf]
  %v498 = vld [vmem:[%s9 + $0x18] sm:$0xf]
  %v499 = vld [vmem:[%s9 + $0x1c] sm:$0xf]
  %v508 = vunpack.c.l.b16 %v492
  %v509 = vunpack.c.l.b16 %v493
  %v510 = vunpack.c.l.b16 %v494
  %v511 = vunpack.c.l.b16 %v495
  %v512 = vunpack.c.l.b16 %v496
  %v513 = vunpack.c.l.b16 %v497
  %v514 = vunpack.c.l.b16 %v498
  %v515 = vunpack.c.l.b16 %v499
  %v516 = vpack.c.b16 %v509, %v508
  %v517 = vpack.c.b16 %v511, %v510
  %v518 = vpack.c.b16 %v513, %v512
  %v519 = vpack.c.b16 %v515, %v514
  %v525 = vsel %vm156, %v491, 0
  %527 = vmatprep.subr.bf16.mxu0 0
  %528 = vmatpush1.bf16.msra.mxu0 %v516
  %529 = vmatprep.subr.bf16.mxu0 0
  %530 = vmatpush1.bf16.msra.mxu0 %v517
  %531 = vmatprep.subr.bf16.mxu0 0
  %532 = vmatpush1.bf16.msra.mxu0 %v518
  %533 = vmatprep.subr.bf16.mxu0 0
  %534 = vmatpush1.bf16.msra.mxu0 %v519
  %535 = vmatprep.subr.bf16.mxu0 0
  %536 = vmatpush1.bf16.msra.mxu0 0
  %537 = vmatprep.subr.bf16.mxu0 0
  %538 = vmatpush1.bf16.msra.mxu0 0
  %539 = vmatprep.subr.bf16.mxu0 0
  %540 = vmatpush1.bf16.msra.mxu0 0
  %541 = vmatprep.subr.bf16.mxu0 0
  %542 = vmatpush1.bf16.msra.mxu0 0
  %543 = vmatprep.subr.bf16.mxu0 0
  %544 = vmatpush1.bf16.msra.mxu0 0
  %545 = vmatprep.subr.bf16.mxu0 0
  %546 = vmatpush1.bf16.msra.mxu0 0
  %547 = vmatprep.subr.bf16.mxu0 0
  %548 = vmatpush1.bf16.msra.mxu0 0
  %549 = vmatprep.subr.bf16.mxu0 0
  %550 = vmatpush1.bf16.msra.mxu0 0
  %551 = vmatprep.subr.bf16.mxu0 0
  %552 = vmatpush1.bf16.msra.mxu0 0
  %553 = vmatprep.subr.bf16.mxu0 0
  %554 = vmatpush1.bf16.msra.mxu0 0
  %555 = vmatprep.subr.bf16.mxu0 0
  %556 = vmatpush1.bf16.msra.mxu0 0
  %557 = vmatprep.subr.bf16.mxu0 0
  %558 = vmatpush1.bf16.msra.mxu0 0
  %559 = vmatprep.mubr.bf16.mxu0 0
  %560 = vmatmul.mubr.bf16.gmra.mrb[0].mxu0 %v525
  %v561 = vpop.f32.mrb[0].mxu0
  %v562 = vadd.f32 0.0, %v561
  %v563 = vpop.f32.mrb[0].mxu0
  %v564 = vpop.f32.mrb[0].mxu0
  %v565 = vpop.f32.mrb[0].mxu0
  %566 = vdwg.mxu0
  %v567 = vld [vmem:[%s10] sm:$0xf]
  %v568 = vld [vmem:[%s10 + $0x4] sm:$0xf]
  %v569 = vld [vmem:[%s10 + $0x8] sm:$0xf]
  %v570 = vld [vmem:[%s10 + $0xc] sm:$0xf]
  %v571 = vld [vmem:[%s10 + $0x10] sm:$0xf]
  %v572 = vld [vmem:[%s10 + $0x14] sm:$0xf]
  %v573 = vld [vmem:[%s10 + $0x18] sm:$0xf]
  %v574 = vld [vmem:[%s10 + $0x1c] sm:$0xf]
  %v575 = vld [vmem:[%s11] sm:$0x1]
  %v577 = vlaneseq
  %v578 = vshrl.u32 %v577, 7
  %v579 = vsub.s32 0, %v578
  %v580 = vrot.slane %v575, %v579
  %v590 = vunpack.c.l.b16 %v567
  %v591 = vunpack.c.l.b16 %v568
  %v592 = vunpack.c.l.b16 %v569
  %v593 = vunpack.c.l.b16 %v570
  %v594 = vunpack.c.l.b16 %v571
  %v595 = vunpack.c.l.b16 %v572
  %v596 = vunpack.c.l.b16 %v573
  %v597 = vunpack.c.l.b16 %v574
  %v598 = vpack.c.b16 %v591, %v590
  %v599 = vpack.c.b16 %v593, %v592
  %v600 = vpack.c.b16 %v595, %v594
  %v601 = vpack.c.b16 %v597, %v596
  %606 = vmatprep.subr.bf16.mxu0 0
  %607 = vmatpush1.bf16.msra.mxu0 %v598
  %608 = vmatprep.subr.bf16.mxu0 0
  %609 = vmatpush1.bf16.msra.mxu0 %v599
  %610 = vmatprep.subr.bf16.mxu0 0
  %611 = vmatpush1.bf16.msra.mxu0 %v600
  %612 = vmatprep.subr.bf16.mxu0 0
  %613 = vmatpush1.bf16.msra.mxu0 %v601
  %614 = vmatprep.subr.bf16.mxu0 0
  %615 = vmatpush1.bf16.msra.mxu0 0
  %616 = vmatprep.subr.bf16.mxu0 0
  %617 = vmatpush1.bf16.msra.mxu0 0
  %618 = vmatprep.subr.bf16.mxu0 0
  %619 = vmatpush1.bf16.msra.mxu0 0
  %620 = vmatprep.subr.bf16.mxu0 0
  %621 = vmatpush1.bf16.msra.mxu0 0
  %622 = vmatprep.subr.bf16.mxu0 0
  %623 = vmatpush1.bf16.msra.mxu0 0
  %624 = vmatprep.subr.bf16.mxu0 0
  %625 = vmatpush1.bf16.msra.mxu0 0
  %626 = vmatprep.subr.bf16.mxu0 0
  %627 = vmatpush1.bf16.msra.mxu0 0
  %628 = vmatprep.subr.bf16.mxu0 0
  %629 = vmatpush1.bf16.msra.mxu0 0
  %630 = vmatprep.subr.bf16.mxu0 0
  %631 = vmatpush1.bf16.msra.mxu0 0
  %632 = vmatprep.subr.bf16.mxu0 0
  %633 = vmatpush1.bf16.msra.mxu0 0
  %634 = vmatprep.subr.bf16.mxu0 0
  %635 = vmatpush1.bf16.msra.mxu0 0
  %636 = vmatprep.subr.bf16.mxu0 0
  %637 = vmatpush1.bf16.msra.mxu0 0
  %638 = vmatprep.mubr.bf16.mxu0 0
  %639 = vmatmul.mubr.bf16.gmra.mrb[0].mxu0 %v525
  %v640 = vpop.f32.mrb[0].mxu0
  %v641 = vadd.f32 %v580, %v640
  %v642 = vpop.f32.mrb[0].mxu0
  %v643 = vpop.f32.mrb[0].mxu0
  %v644 = vpop.f32.mrb[0].mxu0
  %645 = vdwg.mxu0
  %v646 = vxor.u32 %v641, 2147483648
  %v647 = vmul.f32 %v646, 1.442695
  %v648 = vpow.pop %v647
  %v649 = vadd.f32 %v648, 1.0
  %v650 = vrcp.pop %v649
  %v651 = vmul.f32 1.0, %v650
  %653 = vrot.lane.b32.xlu0 %v651, 58
  %v654 = vpop.permute.xlu0 %653
  %657 = vrot.lane.b32.xlu0 %v311, 125
  %v658 = vpop.permute.xlu0 %657
  %v660 = vsel %vm74, %v562, %v654
  %vm661 = vcmask 1022976
  %v662 = vsel %vm661, %v660, %v658
  %vm663 = vcmask 105472
  %v664 = vsel %vm663, %v658, 0.0
  %v667 = vcombine.low %v662, %v664
  %v669 = vunpack.c.l.s4 1983009808
  %v670 = vunpack.c.0.s8 %v669
  %v671 = vlaneseq
  %v672 = vshrl.u32 %v671, 7
  %v673 = vsub.s32 %v670, %v672
  %v674 = vrot.slane %v667, %v673
  %676 = vst [vmem:[%s12] sm:$0xf] %v674
  // Predicated region
  $region50: #{idsvae_forward.1} parent=0 // pred_check
    _
  $region51: #{idsvae_forward.1} parent=0 // pred_check_branch
    %678 = sbr.rel (0) target = $region53
  $region52: #{idsvae_forward.1} parent=0 // pred_region
    _
  $region53: #{idsvae_forward.1} parent=0 // pred_fallthru
    _
  // Predicated region
  $region54: #{idsvae_forward.1} parent=0 // pred_check
    _
  $region55: #{idsvae_forward.1} parent=0 // pred_check_branch
    %680 = sbr.rel (0) target = $region57
  $region56: #{idsvae_forward.1} parent=0 // pred_region
    _
  $region57: #{idsvae_forward.1} parent=0 // pred_fallthru
    _

</llo_original>
